<compile_context>
chip_gen: v5e
topology: v5e:2x2
jax: 0.10.0
libtpu: 0.0.40
codegen_flags: <defaults>
</compile_context>

<pallas_src>
import functools

import jax
import jax.numpy as jnp
from jax.experimental import pallas as pl
from jax.experimental.pallas import tpu as pltpu

LANE = 128         # lane width: keep the output last dim lane-dense (full vst)
SUBLANE = 8        # f32 sublane multiple
MAX_TILE_B = 1024  # max batch tile rows (sweepable; ~0.5 MiB output tile)


def _round_up(n, m):
    return ((n + m - 1) // m) * m


def _choose_tile_b(bp):
    """Batch tile: multiple of 8, <= MAX_TILE_B, and (for bp >= 16) at most
    ~half the padded batch so the grid has >= 2 'parallel' steps (v7x has two
    TensorCores; extra steps cost nothing on v5e/v6e)."""
    if bp < 2 * SUBLANE:
        return bp
    half = _round_up((bp + 1) // 2, SUBLANE)
    return min(MAX_TILE_B, half)


# ----------------------------- Pallas kernel ---------------------------------
def _linear_kernel(x_ref, w_ref, b_ref, o_ref):
    # One batch tile per grid step.  x is (tile_b, Din) at natural width,
    # w is (Din, 128) and stays VMEM-resident (constant index_map).
    # Output tile is 128-lane dense -> unmasked stores; bias add fused.
    acc = jnp.dot(x_ref[...], w_ref[...], preferred_element_type=jnp.float32)
    o_ref[...] = (acc + b_ref[...]).astype(o_ref.dtype)


@functools.partial(jax.jit, static_argnames=("out_features",))
def _fused_forward(w_pad, b_pad, *parts, out_features):
    """Fused forward: concat(x, t, y) -> batch pad -> pallas linear -> crop.

    parts: one or more (B, k_i) f32 arrays whose widths sum to w_pad.shape[0].
    w_pad: (Din, Dout_p), b_pad: (1, Dout_p), Dout_p a multiple of 128.
    Everything traces into one XLA program, so the concat / pad / crop glue
    fuses around the custom call (no eager full-slab HBM round trips).
    """
    x = parts[0] if len(parts) == 1 else jnp.concatenate(parts, axis=-1)
    bsz, din = x.shape
    dout_p = w_pad.shape[1]

    bp = _round_up(bsz, SUBLANE)
    if bp != bsz:
        x = jnp.pad(x, ((0, bp - bsz), (0, 0)))

    tile_b = _choose_tile_b(bp)
    grid = (pl.cdiv(bp, tile_b),)  # ragged last block OK: extra rows cropped

    out_pad = pl.pallas_call(
        _linear_kernel,
        out_shape=jax.ShapeDtypeStruct((bp, dout_p), jnp.float32),
        grid_spec=pltpu.PrefetchScalarGridSpec(
            num_scalar_prefetch=0,
            grid=grid,
            in_specs=[
                # x at its natural feature width (block dim == full array dim,
                # so no 128-lane padding of Din is required).
                pl.BlockSpec((tile_b, din), lambda i: (i, 0)),
                # Weight / bias: constant block index -> no per-step re-DMA.
                pl.BlockSpec((din, dout_p), lambda i: (0, 0)),
                pl.BlockSpec((1, dout_p), lambda i: (0, 0)),
            ],
            out_specs=pl.BlockSpec((tile_b, dout_p), lambda i: (i, 0)),
        ),
        # NOTE: if MAX_TILE_B is ever raised past ~2K rows, set
        # vmem_limit_bytes here (v5e scoped default is only 16 MiB).
        compiler_params=pltpu.CompilerParams(
            dimension_semantics=("parallel",)),
    )(x, w_pad, b_pad)

    return out_pad[:bsz, :out_features]


# --------------------------- MockModel in JAX ---------------------------------
def _init_linear_params(in_features, out_features):
    """Deterministic PyTorch-style init: U(-1/sqrt(in), 1/sqrt(in))."""
    key = jax.random.PRNGKey(1000 + in_features)
    kw, kb = jax.random.split(key)
    bound = 1.0 / float(in_features) ** 0.5
    w_t = jax.random.uniform(kw, (in_features, out_features), jnp.float32,
                             minval=-bound, maxval=bound)
    b = jax.random.uniform(kb, (1, out_features), jnp.float32,
                           minval=-bound, maxval=bound)
    return w_t, b


class MockModel:
    """JAX/Pallas port of the PyTorch MockModel."""

    def __init__(self, input_dim=10, output_dim=10):
        self.out_features = output_dim
        self._dout_pad = _round_up(output_dim, LANE)
        self._set_params(input_dim)

    # -- weight handling ------------------------------------------------------
    def _set_params(self, in_features):
        self.in_features = in_features
        self.w_t, self.b = _init_linear_params(in_features, self.out_features)
        pad = self._dout_pad - self.out_features
        # Only the OUTPUT dim is padded (128 lanes for dense stores); the
        # input dim stays at its natural width.
        self.w_pad = jnp.pad(self.w_t, ((0, 0), (0, pad)))
        self.b_pad = jnp.pad(self.b, ((0, 0), (0, pad)))

    def _maybe_reinit(self, new_in):
        # Mirrors the PyTorch mock: re-create the linear layer (fresh weights)
        # whenever the incoming feature width changes.
        if new_in != self.in_features:
            self._set_params(new_in)

    # -- forward --------------------------------------------------------------
    def __call__(self, x, t=None, y=None, **kwargs):
        x = jnp.asarray(x, jnp.float32)
        lead_shape = None
        was_1d = False

        if t is not None:
            t = jnp.asarray(t, jnp.float32)
            if t.ndim > 0 and t.shape[-1] == 1:
                t = jnp.squeeze(t, axis=-1)
            if t.ndim == 0:
                t = t.reshape(1)
            if t.ndim == 1:
                t = t[:, None]
            if x.ndim > 2:
                x = x.reshape(x.shape[0], -1)          # torch flatten(1)
            if t.shape[0] != x.shape[0]:
                t = jnp.broadcast_to(t, (x.shape[0], t.shape[1]))

        # nn.Linear semantics for remaining shapes (t-present path is now 2-D).
        if x.ndim > 2:
            lead_shape = x.shape[:-1]
            x = x.reshape(-1, x.shape[-1])
        elif x.ndim == 1:
            was_1d = True
            x = x[None, :]

        parts = [x]
        if t is not None:
            parts.append(t)
        if y is not None:
            # TODO(synk): >2-D x with y but no t is ill-defined in the original
            # PyTorch mock as well (torch.cat would fail); not handled.
            y = jnp.asarray(y, jnp.float32)
            if y.ndim == 1:
                y = y[:, None]
            parts.append(y)

        feat = sum(int(p.shape[-1]) for p in parts)
        self._maybe_reinit(feat)

        out = _fused_forward(self.w_pad, self.b_pad, *parts,
                             out_features=self.out_features)
        if lead_shape is not None:
            out = out.reshape(*lead_shape, self.out_features)
        elif was_1d:
            out = out[0]
        return out


# ------------------------------- demo / check ---------------------------------
if __name__ == "__main__":
    key = jax.random.PRNGKey(0)
    kx, kt, ky = jax.random.split(key, 3)

    batch, input_dim, output_dim = 8, 10, 10
    model = MockModel(input_dim=input_dim, output_dim=output_dim)
    hi = jax.lax.Precision.HIGHEST

    # Case 1: plain x -> linear(10 -> 10)
    x = jax.random.normal(kx, (batch, input_dim), jnp.float32)
    out1 = model(x)
    jax.block_until_ready(out1)
    ref1 = jnp.dot(x, model.w_t, precision=hi) + model.b
    assert out1.shape == (batch, output_dim)
    assert jnp.allclose(out1, ref1, atol=1e-4, rtol=1e-4)

    # Case 2: x with timestep t -> logical concat, deterministic re-init 11 -> 10
    t = jax.random.normal(kt, (batch, 1), jnp.float32)
    out2 = model(x, t=t)
    jax.block_until_ready(out2)
    xt = jnp.concatenate([x, t], axis=-1)
    ref2 = jnp.dot(xt, model.w_t, precision=hi) + model.b
    assert out2.shape == (batch, output_dim)
    assert jnp.allclose(out2, ref2, atol=1e-4, rtol=1e-4)

    # Case 3: x with t and label y -> 12 features, same kernel structure
    yv = jax.random.normal(ky, (batch,), jnp.float32)
    out3 = model(x, t=t, y=yv)
    jax.block_until_ready(out3)
    xty = jnp.concatenate([x, t, yv[:, None]], axis=-1)
    ref3 = jnp.dot(xty, model.w_t, precision=hi) + model.b
    assert out3.shape == (batch, output_dim)
    assert jnp.allclose(out3, ref3, atol=1e-4, rtol=1e-4)

    print("KERNEL_OK")
</pallas_src>

<mosaic_0001>
module attributes {stable_mosaic.version = 11 : i64} {
  func.func @_linear_kernel(%arg0: i32, %arg1: memref<8x10xf32, #tpu.memory_space<vmem>>, %arg2: memref<10x128xf32, #tpu.memory_space<vmem>>, %arg3: memref<1x128xf32, #tpu.memory_space<vmem>>, %arg4: memref<8x128xf32, #tpu.memory_space<vmem>>) attributes {dimension_semantics = [#tpu.dimension_semantics<parallel>], iteration_bounds = array<i64: 1>, scalar_prefetch = 0 : i64, scratch_operands = 0 : i64, tpu.core_type = #tpu.core_type<tc>, window_params = [{transform_indices = @transform_0, window_bounds = array<i64: 8, 10>}, {pipeline_mode = #tpu.pipeline_mode<synchronous>, transform_indices = @transform_1, window_bounds = array<i64: 10, 128>}, {pipeline_mode = #tpu.pipeline_mode<synchronous>, transform_indices = @transform_2, window_bounds = array<i64: 1, 128>}, {transform_indices = @transform_3, window_bounds = array<i64: 8, 128>}]} {
    %c0 = arith.constant 0 : index
    %c0_0 = arith.constant 0 : index
    %0 = vector.load %arg1[%c0, %c0_0] : memref<8x10xf32, #tpu.memory_space<vmem>>, vector<8x10xf32>
    %c0_1 = arith.constant 0 : index
    %c0_2 = arith.constant 0 : index
    %1 = vector.load %arg2[%c0_1, %c0_2] : memref<10x128xf32, #tpu.memory_space<vmem>>, vector<10x128xf32>
    %cst = arith.constant dense<0.000000e+00> : vector<8x128xf32>
    %2 = tpu.matmul %0, %1, %cst {dimension_numbers = #tpu.dot_dimension_numbers<[1], [0], [0], [1], [0, 0, 1, 1], [], []>} : vector<8x10xf32>, vector<10x128xf32>, vector<8x128xf32> -> vector<8x128xf32>
    %c0_3 = arith.constant 0 : index
    %c0_4 = arith.constant 0 : index
    %3 = vector.load %arg3[%c0_3, %c0_4] : memref<1x128xf32, #tpu.memory_space<vmem>>, vector<1x128xf32>
    %4 = vector.broadcast %3 : vector<1x128xf32> to vector<8x128xf32>
    %5 = arith.addf %2, %4 : vector<8x128xf32>
    %c0_5 = arith.constant 0 : index
    %c0_6 = arith.constant 0 : index
    %6 = vector.load %arg4[%c0_5, %c0_6] : memref<8x128xf32, #tpu.memory_space<vmem>>, vector<8x128xf32>
    tpu.vector_store %arg4[%c0_5, %c0_6], %5 {strides = array<i32>} : memref<8x128xf32, #tpu.memory_space<vmem>>, vector<8x128xf32>,
    return
  }
  func.func @transform_0(%arg0: i32) -> (i32, i32) {
    %c0_i32 = arith.constant 0 : i32
    %c0_i32_0 = arith.constant 0 : i32
    return %arg0, %c0_i32 : i32, i32
  }
  func.func @transform_1(%arg0: i32) -> (i32, i32) {
    %c0_i32 = arith.constant 0 : i32
    %c0_i32_0 = arith.constant 0 : i32
    %c0_i32_1 = arith.constant 0 : i32
    return %c0_i32, %c0_i32_0 : i32, i32
  }
  func.func @transform_2(%arg0: i32) -> (i32, i32) {
    %c0_i32 = arith.constant 0 : i32
    %c0_i32_0 = arith.constant 0 : i32
    %c0_i32_1 = arith.constant 0 : i32
    return %c0_i32, %c0_i32_0 : i32, i32
  }
  func.func @transform_3(%arg0: i32) -> (i32, i32) {
    %c0_i32 = arith.constant 0 : i32
    %c0_i32_0 = arith.constant 0 : i32
    return %arg0, %c0_i32 : i32, i32
  }
}

</mosaic_0001>

<llo_original>
// kernel: _fused_forward.1
$region0: #{_fused_forward.1}
  #allocation0 [shape = 'u32[]', space=smem, size = 0x4, offset = 0x4, fixed_abs, tag = 'smem constant byte address 0x4 - core index']
  #allocation1 [shape = 'u32[72,128]{1,0:T(1,128)}', space=vmem, size = 0x9000, scoped, tag = 'internal scratch']
  %s0 = inlined_call_operand.hbm [shape: f32[8,10], index: 0, kind: input, shape index: {}]
  %s1 = inlined_call_operand.hbm [shape: f32[10,128], index: 1, kind: input, shape index: {}]
  %s2 = inlined_call_operand.hbm [shape: f32[1,128], index: 2, kind: input, shape index: {}]
  %s3 = inlined_call_operand.hbm [shape: f32[8,128], index: 3, kind: output, shape index: {}]
  %s4 = sld [smem:[#allocation0]]
  $region34: #{_fused_forward.1} parent=0
    _
  %s6 = ssub.s32 1, %s4
  %s7 = scalar_select 0, %s6, %s4
  $region1: #{_fused_forward.1} parent=0
    #allocation2 [shape = 'u8[4096]{0}', space=vmem, size = 0x1000, scoped, tag = 'input window, operand 0, single buffered']
    #allocation3 [shape = 's32[1]{0}', space=sflag, size = 0x4, scoped, tag = 'scoped memory for _fused_forward.1']
    #allocation4 [shape = 's32[1]{0}', space=sflag, size = 0x4, scoped, tag = 'scoped memory for _fused_forward.1']
    #allocation5 [shape = 'u8[8192]{0}', space=vmem, size = 0x2000, scoped, tag = 'input window, operand 1, single buffered']
    #allocation6 [shape = 's32[1]{0}', space=sflag, size = 0x4, scoped, tag = 'scoped memory for _fused_forward.1']
    #allocation7 [shape = 'u8[512]{0}', space=vmem, size = 0x400, scoped, tag = 'input window, operand 2, single buffered']
    #allocation8 [shape = 'u8[4096]{0}', space=vmem, size = 0x1000, scoped, tag = 'output window, operand 0, single buffered']
    %8 = vsyncpa [#allocation3], 0
    %9 = vsyncpa [#allocation6], 0
    %10 = vsyncpa [#allocation4], 0
    // Predicated region
    $region2: #{_fused_forward.1} parent=1 // pred_check
      _
    $region3: #{_fused_forward.1} parent=1 // pred_check_branch
      %12 = sbr.rel (0) target = $region5
    $region4: #{_fused_forward.1} parent=1 // pred_region
      %14 = vsyncadd [#allocation3], 0
      %s16 = sshll.u32 %s0, 4
      %s17 = int_to_ptr.hbm [resolvable:$true] %s16
      %s18 = sshll.u32 [#allocation2], 4
      %s19 = int_to_ptr.vmem [resolvable:$true] %s18
      %21 = dma.hbm_to_vmem [thread:$0]  %s17, 128, %s19, [#allocation3]
    $region5: #{_fused_forward.1} parent=1 // pred_fallthru
      _
    // Predicated region
    $region6: #{_fused_forward.1} parent=1 // pred_check
      _
    $region7: #{_fused_forward.1} parent=1 // pred_check_branch
      %23 = sbr.rel (0) target = $region9
    $region8: #{_fused_forward.1} parent=1 // pred_region
      %25 = vsyncadd [#allocation6], 0
      %s26 = sshll.u32 %s1, 4
      %s27 = int_to_ptr.hbm [resolvable:$true] %s26
      %s28 = sshll.u32 [#allocation5], 4
      %s29 = int_to_ptr.vmem [resolvable:$true] %s28
      %34 = dma.hbm_to_vmem [thread:$0]  %s27, 256, %s29, [#allocation6], 128, 128, 8
    $region9: #{_fused_forward.1} parent=1 // pred_fallthru
      _
    // Predicated region
    $region10: #{_fused_forward.1} parent=1 // pred_check
      _
    $region11: #{_fused_forward.1} parent=1 // pred_check_branch
      %36 = sbr.rel (0) target = $region13
    $region12: #{_fused_forward.1} parent=1 // pred_region
      %38 = vsyncadd [#allocation6], 0
      %s40 = sshll.u32 %s2, 4
      %s41 = int_to_ptr.hbm [resolvable:$true] %s40
      %s42 = sshll.u32 [#allocation7], 4
      %s43 = int_to_ptr.vmem [resolvable:$true] %s42
      %45 = dma.hbm_to_vmem [thread:$0]  %s41, 16, %s43, [#allocation6]
    $region13: #{_fused_forward.1} parent=1 // pred_fallthru
      _
    // Predicated region
    $region14: #{_fused_forward.1} parent=1 // pred_check
      _
    $region15: #{_fused_forward.1} parent=1 // pred_check_branch
      %47 = sbr.rel (0) target = $region17
    $region16: #{_fused_forward.1} parent=1 // pred_region
      %49 = dma.done [#allocation3], 128
    $region17: #{_fused_forward.1} parent=1 // pred_fallthru
      _
    // Predicated region
    $region18: #{_fused_forward.1} parent=1 // pred_check
      _
    $region19: #{_fused_forward.1} parent=1 // pred_check_branch
      %51 = sbr.rel (0) target = $region21
    $region20: #{_fused_forward.1} parent=1 // pred_region
      %53 = dma.done [#allocation6], 256
    $region21: #{_fused_forward.1} parent=1 // pred_fallthru
      _
    // Predicated region
    $region22: #{_fused_forward.1} parent=1 // pred_check
      _
    $region23: #{_fused_forward.1} parent=1 // pred_check_branch
      %55 = sbr.rel (0) target = $region25
    $region24: #{_fused_forward.1} parent=1 // pred_region
      %57 = dma.done [#allocation6], 16
    $region25: #{_fused_forward.1} parent=1 // pred_fallthru
      _
    %v58 = vld [vmem:[#allocation2] sm:$0xff]
    %v59 = vld [vmem:[#allocation5] sm:$0xff]
    %v60 = vld [vmem:[#allocation5 + $0x8] sm:$0x3]
    %v61 = vld [vmem:[#allocation7] sm:$0x1]
    %v63 = vperm.slane %v61, 0
    %vm65 = vcmask 80896
    %v67 = vsel %vm65, %v58, 0
    %vm69 = vcmask 1041408
    %v71 = vsel %vm69, %v60, 0
    %73 = vmatpush.msra.mxu0 0.0
    %74 = vmatpush.msra.mxu0 0.0
    %75 = vmatpush.msra.mxu0 0.0
    %76 = vmatpush.msra.mxu0 0.0
    %77 = vmatpush.msra.mxu0 0.0
    %78 = vmatpush.msra.mxu0 0.0
    %79 = vmatpush.msra.mxu0 0.0
    %80 = vmatpush.msra.mxu0 0.0
    %81 = vmatpush.msra.mxu0 0.0
    %82 = vmatpush.msra.mxu0 0.0
    %83 = vmatpush.msra.mxu0 0.0
    %84 = vmatpush.msra.mxu0 0.0
    %85 = vmatpush.msra.mxu0 0.0
    %86 = vmatpush.msra.mxu0 0.0
    %87 = vmatpush.msra.mxu0 %v71
    %88 = vmatpush.msra.mxu0 %v59
    %89 = vmatmul.f32.gmra.mxu0 %v67
    %v90 = vpop.f32.mrf.mxu0
    %v91 = vadd.f32 %v63, %v90
    %92 = vdwg.mxu0
    %93 = vst [vmem:[#allocation8] sm:$0xff] %v91
    // Predicated region
    $region26: #{_fused_forward.1} parent=1 // pred_check
      _
    $region27: #{_fused_forward.1} parent=1 // pred_check_branch
      %95 = sbr.rel (0) target = $region29
    $region28: #{_fused_forward.1} parent=1 // pred_region
      %97 = vsyncadd [#allocation4], 0
      %s99 = sshll.u32 [#allocation8], 4
      %s100 = int_to_ptr.vmem [resolvable:$true] %s99
      %s101 = sshll.u32 %s3, 4
      %s102 = int_to_ptr.hbm [resolvable:$true] %s101
      %104 = dma.vmem_to_hbm [thread:$0]  %s100, 128, %s102, [#allocation4]
    $region29: #{_fused_forward.1} parent=1 // pred_fallthru
      _
    // Predicated region
    $region30: #{_fused_forward.1} parent=1 // pred_check
      _
    $region31: #{_fused_forward.1} parent=1 // pred_check_branch
      %106 = sbr.rel (0) target = $region33
    $region32: #{_fused_forward.1} parent=1 // pred_region
      %108 = dma.done [#allocation4], 128
    $region33: #{_fused_forward.1} parent=1 // pred_fallthru
      _
    %109 = vsyncpa [#allocation3], 1
    %110 = vsyncpa [#allocation6], 1
    %111 = vsyncpa [#allocation4], 1

</llo_original>
